<compile_context>
chip_gen: v6e
topology: v6e:2x2x1
jax: 0.10.0
libtpu: 0.0.40
codegen_flags: <defaults>
</compile_context>

<pallas_src>
import functools
import math

import jax
import jax.numpy as jnp
from jax.experimental import pallas as pl
from jax.experimental.pallas import tpu as pltpu

NUM_STATS = 8   # 7 statistics + 1 pad slot
# stat indices: 0 loss_sum, 1 bg_correct, 2 bg_count, 3 obj_correct,
#               4 obj_count, 5 err_sum, 6 active_count, 7 unused

_X_BLOCK_BUDGET = 8 * 1024 * 1024   # bytes per (C, TILE_R, 128) x buffer (Pallas double-buffers it)
_MAX_TILE_R = 1024                  # up to 1024 rows x 128 lanes per tile
_VMEM_LIMIT = 32 * 1024 * 1024      # raise v5e's 16 MiB scoped default; fits v7x's 64 MiB physical


def _choose_tile_r(c, rows, itemsize):
    """Row-tile size: as big as the VMEM budget allows (multiple of 32 so the
    f32 / bf16 / int8 streams all satisfy their sublane tiling), or the full
    row extent for small maps (the 'equal full dim' escape)."""
    fit = (_X_BLOCK_BUDGET // (c * 128 * itemsize)) // 32 * 32
    cap = max(32, min(_MAX_TILE_R, fit))
    return rows if rows <= cap else cap


# ----------------------------------------------------------------------------
# In-kernel helpers
# ----------------------------------------------------------------------------
def _project(x_ref, w_ref, b_ref, channels):
    """1x1 conv as a per-channel scalar multiply-accumulate.

    x_ref: VMEM (C, TILE_R, 128); w_ref: SMEM (C,); b_ref: SMEM (1,).
    Keeps the live vreg set to ~one (TILE_R,128) accumulator (no (C,TR,128)
    intermediate), which is what lets TILE_R grow to 1024 without spills.
    """
    logits = x_ref[0].astype(jnp.float32) * w_ref[0]
    for c in range(1, channels):
        logits = logits + x_ref[c].astype(jnp.float32) * w_ref[c]
    return logits + b_ref[0]


def _accumulate_stats(stats_ref, stat_vals, tile_r):
    """Fold each (TILE_R, 128) statistic into the (NUM_STATS, 8, 128)
    lane/sublane-resident accumulator with VALU-only adds (no XLU reduce)."""
    r8 = (tile_r // 8) * 8
    rem = tile_r - r8
    for i, v in enumerate(stat_vals):
        v = v.astype(jnp.float32)
        if r8:
            stats_ref[i] += v[:r8].reshape(r8 // 8, 8, 128).sum(axis=0)
        if rem:
            stats_ref[i, :rem, :] += v[r8:]


# ----------------------------------------------------------------------------
# Pallas kernels
# ----------------------------------------------------------------------------
def _seg_loss_kernel(w_ref, b_ref, x_ref, tgt_ref, *rest, disputed_loss,
                     disputed_beta, n_valid, tile_r, channels, has_act):
    """Per-map projection + loss + accuracy statistics.

    w_ref:     SMEM (C,)            1x1 conv weight
    b_ref:     SMEM (1,)            1x1 conv bias
    x_ref:     VMEM (C, TR, 128)    features (batch dim squeezed)
    tgt_ref:   VMEM (TR, 128) bf16  binary target map (values in [0, 1])
    act_ref:   VMEM (TR, 128) int8  active-feature mask (only if has_act)
    stats_ref: VMEM (NUM_STATS, 8, 128)  per-batch resident stat accumulators
    """
    if has_act:
        act_ref, stats_ref = rest
    else:
        (stats_ref,) = rest

    k = pl.program_id(1)   # row-tile index within this batch entry

    @pl.when(k == 0)
    def _():
        stats_ref[...] = jnp.zeros_like(stats_ref)

    logits = _project(x_ref, w_ref, b_ref, channels)

    # Validity mask generated in-kernel: covers the padded 128-lane tail of
    # small maps AND any partial edge row-tile (no HBM mask stream needed).
    row = jax.lax.broadcasted_iota(jnp.int32, (tile_r, 128), 0)
    lane = jax.lax.broadcasted_iota(jnp.int32, (tile_r, 128), 1)
    valid = (k * tile_r + row) * 128 + lane < n_valid

    t = tgt_ref[...].astype(jnp.float32)
    bg = jnp.logical_and(t == 0.0, valid)
    obj = jnp.logical_and(t == 1.0, valid)

    # Numerically stable softplus computed once:
    #   softplus(x) = max(x,0) + log1p(exp(-|x|)); softplus(-x) = softplus(x) - x
    sp = jnp.maximum(logits, 0.0) + jnp.log1p(jnp.exp(-jnp.abs(logits)))
    losses = jnp.where(bg, sp, 0.0)
    losses = jnp.where(obj, sp - logits, losses)

    lin = logits * 0.25 + 0.5          # computed once, reused by preds + disputed branch
    preds = jnp.clip(lin, 0.0, 1.0)
    if disputed_loss:
        disputed = jnp.logical_and(jnp.logical_and(t > 0.0, t < 1.0), valid)
        d = jnp.abs(lin - t)
        sl1 = jnp.where(d < disputed_beta, 0.5 * d * d / disputed_beta,
                        d - 0.5 * disputed_beta)
        losses = jnp.where(disputed, sl1, losses)

    if has_act:
        active = jnp.logical_and(act_ref[...].astype(jnp.float32) > 0.5, valid)
    else:
        active = valid                 # feat_masks is None -> all features active

    pred_b = preds > 0.5
    bg_acc = jnp.logical_and(bg, active)
    obj_acc = jnp.logical_and(obj, active)
    bg_cor = jnp.logical_and(bg_acc, jnp.logical_not(pred_b))
    obj_cor = jnp.logical_and(obj_acc, pred_b)
    err = jnp.where(active, jnp.abs(preds - t), 0.0)

    _accumulate_stats(stats_ref,
                      (losses, bg_cor, bg_acc, obj_cor, obj_acc, err, active),
                      tile_r)


def _pred_kernel(w_ref, b_ref, x_ref, o_ref, *, channels):
    """Projection + clamp(logit/4 + 0.5, 0, 1), dense lane-major store."""
    logits = _project(x_ref, w_ref, b_ref, channels)
    o_ref[...] = jnp.clip(logits * 0.25 + 0.5, 0.0, 1.0)


# ----------------------------------------------------------------------------
# Wrapper-side layout helpers (free reshapes; pad only for non-128 tails)
# ----------------------------------------------------------------------------
def _tile_layout(x):
    """(B, C, H, W) -> (B, C, rows, 128); pads the flattened HW axis only when
    H*W is not a multiple of 128 (small maps), otherwise a free reshape."""
    B, C, H, W = x.shape
    N = H * W
    rows = -(-N // 128)
    pad = rows * 128 - N
    xf = x.reshape(B, C, N)
    if pad:
        xf = jnp.pad(xf, ((0, 0), (0, 0), (0, pad)))
    return xf.reshape(B, C, rows, 128), rows, pad


def _flatten_rows(a, rows, pad):
    """(B, H, W) -> (B, rows, 128) with the same optional tail pad."""
    B = a.shape[0]
    af = a.reshape(B, -1)
    if pad:
        af = jnp.pad(af, ((0, 0), (0, pad)))
    return af.reshape(B, rows, 128)


# ----------------------------------------------------------------------------
# pallas_call wrappers (one jit-ted call per feature map)
# ----------------------------------------------------------------------------
# TODO(synk): fuse the per-map pallas_calls into a single PrefetchScalarGridSpec
# call (scalar-prefetched per-map row offsets / weight indices) to amortize
# launch + pipeline warm-up across the many tiny FPN maps.
@functools.partial(jax.jit, static_argnames=("disputed_loss", "disputed_beta"))
def _run_loss_stats(x, w, b, tgt, act, *, disputed_loss, disputed_beta):
    B, C, H, W = x.shape
    N = H * W
    xf, rows, pad = _tile_layout(x)
    tf = _flatten_rows(tgt.astype(jnp.bfloat16), rows, pad)    # bf16 target stream
    tile_r = _choose_tile_r(C, rows, xf.dtype.itemsize)
    kh = -(-rows // tile_r)
    has_act = act is not None

    args = [w, b, xf, tf]
    in_specs = [
        pl.BlockSpec(memory_space=pltpu.MemorySpace.SMEM),     # weight (C,)
        pl.BlockSpec(memory_space=pltpu.MemorySpace.SMEM),     # bias (1,)
        pl.BlockSpec((pl.Squeezed(), C, tile_r, 128), lambda bb, kk: (bb, 0, kk, 0)),
        pl.BlockSpec((pl.Squeezed(), tile_r, 128), lambda bb, kk: (bb, kk, 0)),
    ]
    if has_act:
        args.append(_flatten_rows(act.astype(jnp.int8), rows, pad))  # int8 mask stream
        in_specs.append(
            pl.BlockSpec((pl.Squeezed(), tile_r, 128), lambda bb, kk: (bb, kk, 0)))

    kernel = functools.partial(
        _seg_loss_kernel, disputed_loss=bool(disputed_loss),
        disputed_beta=float(disputed_beta), n_valid=N, tile_r=tile_r,
        channels=C, has_act=has_act)

    # TODO(synk): on v7x, promote the batch axis to pltpu.CORE_PARALLEL (or a
    # pl.core_map over create_tensorcore_mesh) so both TensorCores contribute
    # HBM bandwidth; 'parallel' is harmless on single-core v5e/v6e.
    out = pl.pallas_call(
        kernel,
        out_shape=jax.ShapeDtypeStruct((B, NUM_STATS, 8, 128), jnp.float32),
        grid=(B, kh),
        in_specs=in_specs,
        out_specs=pl.BlockSpec((pl.Squeezed(), NUM_STATS, 8, 128),
                               lambda bb, kk: (bb, 0, 0, 0)),
        compiler_params=pltpu.CompilerParams(
            dimension_semantics=("parallel", "arbitrary"),
            vmem_limit_bytes=_VMEM_LIMIT),
    )(*args)

    # Tiny final cross-batch / cross-lane reduction in plain XLA.
    return out.sum(axis=(0, 2, 3))


@jax.jit
def _run_pred(x, w, b):
    B, C, H, W = x.shape
    N = H * W
    xf, rows, pad = _tile_layout(x)
    tile_r = _choose_tile_r(C, rows, xf.dtype.itemsize)
    kh = -(-rows // tile_r)

    out = pl.pallas_call(
        functools.partial(_pred_kernel, channels=C),
        out_shape=jax.ShapeDtypeStruct((B, rows, 128), jnp.float32),
        grid=(B, kh),
        in_specs=[
            pl.BlockSpec(memory_space=pltpu.MemorySpace.SMEM),
            pl.BlockSpec(memory_space=pltpu.MemorySpace.SMEM),
            pl.BlockSpec((pl.Squeezed(), C, tile_r, 128), lambda bb, kk: (bb, 0, kk, 0)),
        ],
        out_specs=pl.BlockSpec((pl.Squeezed(), tile_r, 128),
                               lambda bb, kk: (bb, kk, 0)),
        compiler_params=pltpu.CompilerParams(
            dimension_semantics=("parallel", "parallel"),
            vmem_limit_bytes=_VMEM_LIMIT),
    )(w, b, xf)
    return out.reshape(B, rows * 128)[:, :N].reshape(B, H, W)


# ----------------------------------------------------------------------------
# BinarySegHead (JAX/Pallas version)
# ----------------------------------------------------------------------------
def _accuracy(correct, count):
    return jnp.where(count > 0, correct / jnp.maximum(count, 1.0), 1.0)


def _analyses_from_stats(s, suffix=''):
    return {
        f'bin_seg_acc{suffix}': 100.0 * _accuracy(s[1] + s[3], s[2] + s[4]),
        f'bin_seg_acc_bg{suffix}': 100.0 * _accuracy(s[1], s[2]),
        f'bin_seg_acc_obj{suffix}': 100.0 * _accuracy(s[3], s[4]),
    }


class BinarySegHeadPallas:
    def __init__(self, feat_sizes, disputed_loss, disputed_beta, loss_weight, key):
        self.disputed_loss = bool(disputed_loss)
        self.disputed_beta = float(disputed_beta)
        self.loss_weight = loss_weight
        # Projector: per map a 1x1 conv (feat_size -> 1), torch Conv2d default init.
        self.weights, self.biases = [], []
        for c in feat_sizes:
            key, k1, k2 = jax.random.split(key, 3)
            bound = 1.0 / math.sqrt(c)
            self.weights.append(jax.random.uniform(k1, (c,), jnp.float32, -bound, bound))
            self.biases.append(jax.random.uniform(k2, (1,), jnp.float32, -bound, bound))

    # TODO(synk): forward_init (target-mask downsampling) and visualize are
    # host-side preprocessing/visualization and are not implemented as Pallas kernels.

    def forward(self, feat_maps, feat_masks=None, tgt_dict=None, **kwargs):
        if tgt_dict is None:
            pred_maps = [_run_pred(fm, w, b)
                         for fm, w, b in zip(feat_maps, self.weights, self.biases)]
            return [{'binary_maps': pred_maps}]

        if feat_masks is None:
            # No HBM mask stream: the kernel uses active == valid.
            feat_masks = [None] * len(feat_maps)

        per_map_stats, sizes = [], []
        for fm, w, b, tgt, msk in zip(feat_maps, self.weights, self.biases,
                                      tgt_dict['binary_maps'], feat_masks):
            B, _, H, W = fm.shape
            sizes.append(B * H * W)
            per_map_stats.append(_run_loss_stats(
                fm, w, b, tgt, msk,
                disputed_loss=self.disputed_loss,
                disputed_beta=self.disputed_beta))

        # bin_seg_loss = loss_weight * sum_i mean(losses of map i)
        loss = sum(s[0] / float(n) for s, n in zip(per_map_stats, sizes))
        loss_dict = {'bin_seg_loss': self.loss_weight * loss}

        tot = sum(per_map_stats)
        analysis_dict = _analyses_from_stats(tot)
        analysis_dict['bin_seg_error'] = tot[5] / tot[6]
        if kwargs.setdefault('extended_analysis', False):
            for i, s in enumerate(per_map_stats):
                analysis_dict.update(_analyses_from_stats(s, suffix=f'_f{i}'))
        return loss_dict, analysis_dict


# ----------------------------------------------------------------------------
# Pure-JAX reference (mirrors the PyTorch forward) for verification
# ----------------------------------------------------------------------------
def _smooth_l1_ref(pred, tgt, beta):
    d = jnp.abs(pred - tgt)
    return jnp.where(d < beta, 0.5 * d * d / beta, d - 0.5 * beta)


def _reference(feat_maps, feat_masks, binary_maps, weights, biases,
               disputed_loss, disputed_beta, loss_weight):
    logit_maps = [jnp.einsum('bchw,c->bhw', fm, w) + b[0]
                  for fm, w, b in zip(feat_maps, weights, biases)]
    logits = jnp.concatenate([lm.reshape(-1) for lm in logit_maps])
    targets = jnp.concatenate([t.reshape(-1).astype(jnp.float32) for t in binary_maps])
    bg = targets == 0
    obj = targets == 1
    losses = jnp.zeros_like(logits)
    losses = jnp.where(bg, jnp.log1p(jnp.exp(logits)), losses)
    losses = jnp.where(obj, jnp.log1p(jnp.exp(-logits)), losses)
    if disputed_loss:
        disputed = (targets > 0) & (targets < 1)
        losses = jnp.where(disputed,
                           _smooth_l1_ref(logits / 4.0 + 0.5, targets, disputed_beta),
                           losses)
    loss, i0 = 0.0, 0
    for lm in logit_maps:
        n = lm.size
        loss = loss + jnp.mean(losses[i0:i0 + n])
        i0 += n
    loss = loss_weight * loss
    preds = jnp.clip(logits / 4.0 + 0.5, 0.0, 1.0)
    active = jnp.concatenate([m.reshape(-1) for m in feat_masks])
    acc_mask = (bg | obj) & active
    pred_b, tgt_b = preds > 0.5, targets > 0.5

    def acc(mask):
        cnt = jnp.sum(mask)
        cor = jnp.sum(mask & (pred_b == tgt_b))
        return jnp.where(cnt > 0, cor / jnp.maximum(cnt, 1), 1.0)

    analysis = {
        'bin_seg_acc': 100.0 * acc(acc_mask),
        'bin_seg_acc_bg': 100.0 * acc(acc_mask & ~tgt_b),
        'bin_seg_acc_obj': 100.0 * acc(acc_mask & tgt_b),
        'bin_seg_error': (jnp.sum(jnp.where(active, jnp.abs(preds - targets), 0.0))
                          / jnp.sum(active)),
    }
    pred_maps = [jnp.clip(lm / 4.0 + 0.5, 0.0, 1.0) for lm in logit_maps]
    return loss, analysis, pred_maps


# ----------------------------------------------------------------------------
if __name__ == "__main__":
    key = jax.random.PRNGKey(0)
    k_params, k_data = jax.random.split(key)
    ks = jax.random.split(k_data, 9)

    feat_sizes = [4, 8, 4]
    B = 2
    feat_maps = [
        jax.random.normal(ks[0], (B, 4, 16, 16), jnp.float32),
        jax.random.normal(ks[1], (B, 8, 8, 8), jnp.float32),    # HW=64: padded tail
        jax.random.normal(ks[2], (B, 4, 24, 24), jnp.float32),  # HW=576: ragged 128-tail
    ]
    # target binary maps with values in {0, 0.5, 1} (0.5 exercises the disputed loss)
    binary_maps = [
        jax.random.randint(ks[3], (B, 16, 16), 0, 3).astype(jnp.float32) / 2.0,
        jax.random.randint(ks[4], (B, 8, 8), 0, 3).astype(jnp.float32) / 2.0,
        jax.random.randint(ks[5], (B, 24, 24), 0, 3).astype(jnp.float32) / 2.0,
    ]
    feat_masks = [
        jax.random.bernoulli(ks[6], 0.8, (B, 16, 16)),
        jax.random.bernoulli(ks[7], 0.8, (B, 8, 8)),
        jax.random.bernoulli(ks[8], 0.8, (B, 24, 24)),
    ]

    head = BinarySegHeadPallas(feat_sizes, disputed_loss=True, disputed_beta=0.1,
                               loss_weight=2.0, key=k_params)

    # training / validation branch (with active-feature masks)
    loss_dict, analysis_dict = head.forward(
        feat_maps, feat_masks=feat_masks,
        tgt_dict={'binary_maps': binary_maps}, extended_analysis=True)
    jax.block_until_ready(loss_dict['bin_seg_loss'])

    # training / validation branch without masks (exercises the skipped act stream)
    loss_dict_nm, analysis_dict_nm = head.forward(
        feat_maps, tgt_dict={'binary_maps': binary_maps})
    jax.block_until_ready(loss_dict_nm['bin_seg_loss'])

    # inference branch
    pred_dicts = head.forward(feat_maps)
    jax.block_until_ready(pred_dicts[0]['binary_maps'][0])

    # verify against pure-JAX reference
    ref_loss, ref_analysis, ref_preds = _reference(
        feat_maps, feat_masks, binary_maps, head.weights, head.biases,
        disputed_loss=True, disputed_beta=0.1, loss_weight=2.0)
    ones_masks = [jnp.ones((B,) + fm.shape[2:], bool) for fm in feat_maps]
    ref_loss_nm, ref_analysis_nm, _ = _reference(
        feat_maps, ones_masks, binary_maps, head.weights, head.biases,
        disputed_loss=True, disputed_beta=0.1, loss_weight=2.0)

    def close(a, b, tol=2e-4):
        return abs(float(a) - float(b)) <= tol * (1.0 + abs(float(b)))

    assert close(loss_dict['bin_seg_loss'], ref_loss), "loss mismatch"
    assert close(loss_dict_nm['bin_seg_loss'], ref_loss_nm), "loss mismatch (no masks)"
    for name in ['bin_seg_acc', 'bin_seg_acc_bg', 'bin_seg_acc_obj', 'bin_seg_error']:
        assert close(analysis_dict[name], ref_analysis[name]), f"{name} mismatch"
        assert close(analysis_dict_nm[name], ref_analysis_nm[name]), f"{name} mismatch (no masks)"
    for got, want in zip(pred_dicts[0]['binary_maps'], ref_preds):
        assert float(jnp.max(jnp.abs(got - want))) < 1e-4, "pred map mismatch"

    print("KERNEL_OK")
</pallas_src>

<mosaic_0001>
module attributes {stable_mosaic.version = 11 : i64} {
  func.func @_seg_loss_kernel(%arg0: i32, %arg1: i32, %arg2: memref<4xf32, #tpu.memory_space<smem>>, %arg3: memref<1xf32, #tpu.memory_space<smem>>, %arg4: memref<1x4x2x128xf32, #tpu.memory_space<vmem>>, %arg5: memref<1x2x128xbf16, #tpu.memory_space<vmem>>, %arg6: memref<1x2x128xi8, #tpu.memory_space<vmem>>, %arg7: memref<1x8x8x128xf32, #tpu.memory_space<vmem>>) attributes {dimension_semantics = [#tpu.dimension_semantics<parallel>, #tpu.dimension_semantics<arbitrary>], iteration_bounds = array<i64: 2, 1>, scalar_prefetch = 0 : i64, scratch_operands = 0 : i64, tpu.core_type = #tpu.core_type<tc>, window_params = [{transform_indices = @transform_0, window_bounds = array<i64: 4>}, {transform_indices = @transform_1, window_bounds = array<i64: 1>}, {transform_indices = @transform_2, window_bounds = array<i64: 1, 4, 2, 128>}, {transform_indices = @transform_3, window_bounds = array<i64: 1, 2, 128>}, {transform_indices = @transform_4, window_bounds = array<i64: 1, 2, 128>}, {transform_indices = @transform_5, window_bounds = array<i64: 1, 8, 8, 128>}]} {
    %c0_i32 = arith.constant 0 : i32
    %0 = arith.cmpi eq, %arg1, %c0_i32 : i32
    %1 = arith.extui %0 : i1 to i32
    %c0_i32_0 = arith.constant 0 : i32
    %2 = arith.cmpi ne, %1, %c0_i32_0 : i32
    scf.if %2 {
      %cst_95 = arith.constant 0.000000e+00 : f32
      %156 = vector.broadcast %cst_95 : f32 to vector<8x8x128xf32>
      %c0_96 = arith.constant 0 : index
      %c0_97 = arith.constant 0 : index
      %c0_98 = arith.constant 0 : index
      %c0_99 = arith.constant 0 : index
      %157 = vector.load %arg7[%c0_96, %c0_97, %c0_98, %c0_99] : memref<1x8x8x128xf32, #tpu.memory_space<vmem>>, vector<1x8x8x128xf32>
      %158 = vector.shape_cast %157 : vector<1x8x8x128xf32> to vector<8x8x128xf32>
      %159 = vector.shape_cast %156 : vector<8x8x128xf32> to vector<1x8x8x128xf32>
      tpu.vector_store %arg7[%c0_96, %c0_97, %c0_98, %c0_99], %159 {strides = array<i32>} : memref<1x8x8x128xf32, #tpu.memory_space<vmem>>, vector<1x8x8x128xf32>,
    } else {
    }
    %c0 = arith.constant 0 : index
    %c0_1 = arith.constant 0 : index
    %c0_2 = arith.constant 0 : index
    %c0_3 = arith.constant 0 : index
    %3 = vector.load %arg4[%c0, %c0_1, %c0_2, %c0_3] : memref<1x4x2x128xf32, #tpu.memory_space<vmem>>, vector<1x1x2x128xf32>
    %4 = vector.shape_cast %3 : vector<1x1x2x128xf32> to vector<2x128xf32>
    %c0_4 = arith.constant 0 : index
    %5 = memref.load %arg2[%c0_4] : memref<4xf32, #tpu.memory_space<smem>>
    %6 = vector.broadcast %5 : f32 to vector<2x128xf32>
    %7 = arith.mulf %4, %6 : vector<2x128xf32>
    %c0_5 = arith.constant 0 : index
    %c1 = arith.constant 1 : index
    %c0_6 = arith.constant 0 : index
    %c0_7 = arith.constant 0 : index
    %8 = vector.load %arg4[%c0_5, %c1, %c0_6, %c0_7] : memref<1x4x2x128xf32, #tpu.memory_space<vmem>>, vector<1x1x2x128xf32>
    %9 = vector.shape_cast %8 : vector<1x1x2x128xf32> to vector<2x128xf32>
    %c1_8 = arith.constant 1 : index
    %10 = memref.load %arg2[%c1_8] : memref<4xf32, #tpu.memory_space<smem>>
    %11 = vector.broadcast %10 : f32 to vector<2x128xf32>
    %12 = arith.mulf %9, %11 : vector<2x128xf32>
    %13 = arith.addf %7, %12 : vector<2x128xf32>
    %c0_9 = arith.constant 0 : index
    %c2 = arith.constant 2 : index
    %c0_10 = arith.constant 0 : index
    %c0_11 = arith.constant 0 : index
    %14 = vector.load %arg4[%c0_9, %c2, %c0_10, %c0_11] : memref<1x4x2x128xf32, #tpu.memory_space<vmem>>, vector<1x1x2x128xf32>
    %15 = vector.shape_cast %14 : vector<1x1x2x128xf32> to vector<2x128xf32>
    %c2_12 = arith.constant 2 : index
    %16 = memref.load %arg2[%c2_12] : memref<4xf32, #tpu.memory_space<smem>>
    %17 = vector.broadcast %16 : f32 to vector<2x128xf32>
    %18 = arith.mulf %15, %17 : vector<2x128xf32>
    %19 = arith.addf %13, %18 : vector<2x128xf32>
    %c0_13 = arith.constant 0 : index
    %c3 = arith.constant 3 : index
    %c0_14 = arith.constant 0 : index
    %c0_15 = arith.constant 0 : index
    %20 = vector.load %arg4[%c0_13, %c3, %c0_14, %c0_15] : memref<1x4x2x128xf32, #tpu.memory_space<vmem>>, vector<1x1x2x128xf32>
    %21 = vector.shape_cast %20 : vector<1x1x2x128xf32> to vector<2x128xf32>
    %c3_16 = arith.constant 3 : index
    %22 = memref.load %arg2[%c3_16] : memref<4xf32, #tpu.memory_space<smem>>
    %23 = vector.broadcast %22 : f32 to vector<2x128xf32>
    %24 = arith.mulf %21, %23 : vector<2x128xf32>
    %25 = arith.addf %19, %24 : vector<2x128xf32>
    %c0_17 = arith.constant 0 : index
    %26 = memref.load %arg3[%c0_17] : memref<1xf32, #tpu.memory_space<smem>>
    %27 = vector.broadcast %26 : f32 to vector<2x128xf32>
    %28 = arith.addf %25, %27 : vector<2x128xf32>
    %29 = tpu.iota {dimensions = array<i32: 0>} : vector<2x128xi32>
    %30 = tpu.iota {dimensions = array<i32: 1>} : vector<2x128xi32>
    %c2_i32 = arith.constant 2 : i32
    %31 = arith.muli %arg1, %c2_i32 : i32
    %32 = vector.broadcast %31 : i32 to vector<2x128xi32>
    %33 = arith.addi %32, %29 : vector<2x128xi32>
    %c128_i32 = arith.constant 128 : i32
    %34 = vector.broadcast %c128_i32 : i32 to vector<2x128xi32>
    %35 = arith.muli %33, %34 : vector<2x128xi32>
    %36 = arith.addi %35, %30 : vector<2x128xi32>
    %c256_i32 = arith.constant 256 : i32
    %37 = vector.broadcast %c256_i32 : i32 to vector<2x128xi32>
    %38 = arith.cmpi slt, %36, %37 : vector<2x128xi32>
    %c0_18 = arith.constant 0 : index
    %c0_19 = arith.constant 0 : index
    %c0_20 = arith.constant 0 : index
    %39 = vector.load %arg5[%c0_18, %c0_19, %c0_20] : memref<1x2x128xbf16, #tpu.memory_space<vmem>>, vector<1x2x128xbf16>
    %40 = vector.shape_cast %39 : vector<1x2x128xbf16> to vector<2x128xbf16>
    %41 = arith.extf %40 : vector<2x128xbf16> to vector<2x128xf32>
    %cst = arith.constant 0.000000e+00 : f32
    %42 = vector.broadcast %cst : f32 to vector<2x128xf32>
    %43 = arith.cmpf oeq, %41, %42 : vector<2x128xf32>
    %44 = arith.andi %43, %38 : vector<2x128xi1>
    %cst_21 = arith.constant 1.000000e+00 : f32
    %45 = vector.broadcast %cst_21 : f32 to vector<2x128xf32>
    %46 = arith.cmpf oeq, %41, %45 : vector<2x128xf32>
    %47 = arith.andi %46, %38 : vector<2x128xi1>
    %cst_22 = arith.constant 0.000000e+00 : f32
    %48 = vector.broadcast %cst_22 : f32 to vector<2x128xf32>
    %49 = arith.maximumf %28, %48 : vector<2x128xf32>
    %50 = math.absf %28 : vector<2x128xf32>
    %cst_23 = arith.constant 0.000000e+00 : f32
    %51 = vector.broadcast %cst_23 : f32 to vector<2x128xf32>
    %52 = arith.subf %51, %50 : vector<2x128xf32>
    %53 = math.exp %52 : vector<2x128xf32>
    %54 = math.log1p %53 : vector<2x128xf32>
    %55 = arith.addf %49, %54 : vector<2x128xf32>
    %cst_24 = arith.constant 0.000000e+00 : f32
    %56 = vector.broadcast %cst_24 : f32 to vector<2x128xf32>
    %57 = arith.select %44, %55, %56 : vector<2x128xi1>, vector<2x128xf32>
    %58 = arith.subf %55, %28 : vector<2x128xf32>
    %59 = arith.select %47, %58, %57 : vector<2x128xi1>, vector<2x128xf32>
    %cst_25 = arith.constant 2.500000e-01 : f32
    %60 = vector.broadcast %cst_25 : f32 to vector<2x128xf32>
    %61 = arith.mulf %28, %60 : vector<2x128xf32>
    %cst_26 = arith.constant 5.000000e-01 : f32
    %62 = vector.broadcast %cst_26 : f32 to vector<2x128xf32>
    %63 = arith.addf %61, %62 : vector<2x128xf32>
    %cst_27 = arith.constant 0.000000e+00 : f32
    %cst_28 = arith.constant 1.000000e+00 : f32
    %64 = vector.broadcast %cst_27 : f32 to vector<2x128xf32>
    %65 = arith.maximumf %64, %63 : vector<2x128xf32>
    %66 = vector.broadcast %cst_28 : f32 to vector<2x128xf32>
    %67 = arith.minimumf %66, %65 : vector<2x128xf32>
    %cst_29 = arith.constant 0.000000e+00 : f32
    %68 = vector.broadcast %cst_29 : f32 to vector<2x128xf32>
    %69 = arith.cmpf ogt, %41, %68 : vector<2x128xf32>
    %cst_30 = arith.constant 1.000000e+00 : f32
    %70 = vector.broadcast %cst_30 : f32 to vector<2x128xf32>
    %71 = arith.cmpf olt, %41, %70 : vector<2x128xf32>
    %72 = arith.andi %69, %71 : vector<2x128xi1>
    %73 = arith.andi %72, %38 : vector<2x128xi1>
    %74 = arith.subf %63, %41 : vector<2x128xf32>
    %75 = math.absf %74 : vector<2x128xf32>
    %cst_31 = arith.constant 1.000000e-01 : f32
    %76 = vector.broadcast %cst_31 : f32 to vector<2x128xf32>
    %77 = arith.cmpf olt, %75, %76 : vector<2x128xf32>
    %cst_32 = arith.constant 5.000000e-01 : f32
    %78 = vector.broadcast %cst_32 : f32 to vector<2x128xf32>
    %79 = arith.mulf %78, %75 : vector<2x128xf32>
    %80 = arith.mulf %79, %75 : vector<2x128xf32>
    %cst_33 = arith.constant 1.000000e-01 : f32
    %81 = vector.broadcast %cst_33 : f32 to vector<2x128xf32>
    %82 = arith.divf %80, %81 : vector<2x128xf32>
    %cst_34 = arith.constant 5.000000e-02 : f32
    %83 = vector.broadcast %cst_34 : f32 to vector<2x128xf32>
    %84 = arith.subf %75, %83 : vector<2x128xf32>
    %85 = arith.select %77, %82, %84 : vector<2x128xi1>, vector<2x128xf32>
    %86 = arith.select %73, %85, %59 : vector<2x128xi1>, vector<2x128xf32>
    %c0_35 = arith.constant 0 : index
    %c0_36 = arith.constant 0 : index
    %c0_37 = arith.constant 0 : index
    %87 = vector.load %arg6[%c0_35, %c0_36, %c0_37] : memref<1x2x128xi8, #tpu.memory_space<vmem>>, vector<1x2x128xi8>
    %88 = vector.shape_cast %87 : vector<1x2x128xi8> to vector<2x128xi8>
    %89 = arith.sitofp %88 : vector<2x128xi8> to vector<2x128xf32>
    %cst_38 = arith.constant 5.000000e-01 : f32
    %90 = vector.broadcast %cst_38 : f32 to vector<2x128xf32>
    %91 = arith.cmpf ogt, %89, %90 : vector<2x128xf32>
    %92 = arith.andi %91, %38 : vector<2x128xi1>
    %cst_39 = arith.constant 5.000000e-01 : f32
    %93 = vector.broadcast %cst_39 : f32 to vector<2x128xf32>
    %94 = arith.cmpf ogt, %67, %93 : vector<2x128xf32>
    %95 = arith.andi %44, %92 : vector<2x128xi1>
    %96 = arith.andi %47, %92 : vector<2x128xi1>
    %cst_40 = arith.constant dense<true> : vector<2x128xi1>
    %97 = arith.xori %94, %cst_40 : vector<2x128xi1>
    %98 = arith.andi %95, %97 : vector<2x128xi1>
    %99 = arith.andi %96, %94 : vector<2x128xi1>
    %100 = arith.subf %67, %41 : vector<2x128xf32>
    %101 = math.absf %100 : vector<2x128xf32>
    %cst_41 = arith.constant 0.000000e+00 : f32
    %102 = vector.broadcast %cst_41 : f32 to vector<2x128xf32>
    %103 = arith.select %92, %101, %102 : vector<2x128xi1>, vector<2x128xf32>
    %c0_42 = arith.constant 0 : index
    %c0_43 = arith.constant 0 : index
    %c0_44 = arith.constant 0 : index
    %c0_45 = arith.constant 0 : index
    %104 = vector.load %arg7[%c0_42, %c0_43, %c0_44, %c0_45] : memref<1x8x8x128xf32, #tpu.memory_space<vmem>>, vector<1x1x2x128xf32>
    %105 = vector.shape_cast %104 : vector<1x1x2x128xf32> to vector<2x128xf32>
    %106 = arith.addf %105, %86 : vector<2x128xf32>
    %c0_46 = arith.constant 0 : index
    %c0_47 = arith.constant 0 : index
    %c0_48 = arith.constant 0 : index
    %c0_49 = arith.constant 0 : index
    %107 = vector.load %arg7[%c0_46, %c0_47, %c0_48, %c0_49] : memref<1x8x8x128xf32, #tpu.memory_space<vmem>>, vector<1x1x2x128xf32>
    %108 = vector.shape_cast %107 : vector<1x1x2x128xf32> to vector<2x128xf32>
    %109 = vector.shape_cast %106 : vector<2x128xf32> to vector<1x1x2x128xf32>
    tpu.vector_store %arg7[%c0_46, %c0_47, %c0_48, %c0_49], %109 {strides = array<i32>} : memref<1x8x8x128xf32, #tpu.memory_space<vmem>>, vector<1x1x2x128xf32>,
    %110 = arith.extui %98 : vector<2x128xi1> to vector<2x128xi32>
    %111 = arith.sitofp %110 : vector<2x128xi32> to vector<2x128xf32>
    %c0_50 = arith.constant 0 : index
    %c1_51 = arith.constant 1 : index
    %c0_52 = arith.constant 0 : index
    %c0_53 = arith.constant 0 : index
    %112 = vector.load %arg7[%c0_50, %c1_51, %c0_52, %c0_53] : memref<1x8x8x128xf32, #tpu.memory_space<vmem>>, vector<1x1x2x128xf32>
    %113 = vector.shape_cast %112 : vector<1x1x2x128xf32> to vector<2x128xf32>
    %114 = arith.addf %113, %111 : vector<2x128xf32>
    %c0_54 = arith.constant 0 : index
    %c1_55 = arith.constant 1 : index
    %c0_56 = arith.constant 0 : index
    %c0_57 = arith.constant 0 : index
    %115 = vector.load %arg7[%c0_54, %c1_55, %c0_56, %c0_57] : memref<1x8x8x128xf32, #tpu.memory_space<vmem>>, vector<1x1x2x128xf32>
    %116 = vector.shape_cast %115 : vector<1x1x2x128xf32> to vector<2x128xf32>
    %117 = vector.shape_cast %114 : vector<2x128xf32> to vector<1x1x2x128xf32>
    tpu.vector_store %arg7[%c0_54, %c1_55, %c0_56, %c0_57], %117 {strides = array<i32>} : memref<1x8x8x128xf32, #tpu.memory_space<vmem>>, vector<1x1x2x128xf32>,
    %118 = arith.extui %95 : vector<2x128xi1> to vector<2x128xi32>
    %119 = arith.sitofp %118 : vector<2x128xi32> to vector<2x128xf32>
    %c0_58 = arith.constant 0 : index
    %c2_59 = arith.constant 2 : index
    %c0_60 = arith.constant 0 : index
    %c0_61 = arith.constant 0 : index
    %120 = vector.load %arg7[%c0_58, %c2_59, %c0_60, %c0_61] : memref<1x8x8x128xf32, #tpu.memory_space<vmem>>, vector<1x1x2x128xf32>
    %121 = vector.shape_cast %120 : vector<1x1x2x128xf32> to vector<2x128xf32>
    %122 = arith.addf %121, %119 : vector<2x128xf32>
    %c0_62 = arith.constant 0 : index
    %c2_63 = arith.constant 2 : index
    %c0_64 = arith.constant 0 : index
    %c0_65 = arith.constant 0 : index
    %123 = vector.load %arg7[%c0_62, %c2_63, %c0_64, %c0_65] : memref<1x8x8x128xf32, #tpu.memory_space<vmem>>, vector<1x1x2x128xf32>
    %124 = vector.shape_cast %123 : vector<1x1x2x128xf32> to vector<2x128xf32>
    %125 = vector.shape_cast %122 : vector<2x128xf32> to vector<1x1x2x128xf32>
    tpu.vector_store %arg7[%c0_62, %c2_63, %c0_64, %c0_65], %125 {strides = array<i32>} : memref<1x8x8x128xf32, #tpu.memory_space<vmem>>, vector<1x1x2x128xf32>,
    %126 = arith.extui %99 : vector<2x128xi1> to vector<2x128xi32>
    %127 = arith.sitofp %126 : vector<2x128xi32> to vector<2x128xf32>
    %c0_66 = arith.constant 0 : index
    %c3_67 = arith.constant 3 : index
    %c0_68 = arith.constant 0 : index
    %c0_69 = arith.constant 0 : index
    %128 = vector.load %arg7[%c0_66, %c3_67, %c0_68, %c0_69] : memref<1x8x8x128xf32, #tpu.memory_space<vmem>>, vector<1x1x2x128xf32>
    %129 = vector.shape_cast %128 : vector<1x1x2x128xf32> to vector<2x128xf32>
    %130 = arith.addf %129, %127 : vector<2x128xf32>
    %c0_70 = arith.constant 0 : index
    %c3_71 = arith.constant 3 : index
    %c0_72 = arith.constant 0 : index
    %c0_73 = arith.constant 0 : index
    %131 = vector.load %arg7[%c0_70, %c3_71, %c0_72, %c0_73] : memref<1x8x8x128xf32, #tpu.memory_space<vmem>>, vector<1x1x2x128xf32>
    %132 = vector.shape_cast %131 : vector<1x1x2x128xf32> to vector<2x128xf32>
    %133 = vector.shape_cast %130 : vector<2x128xf32> to vector<1x1x2x128xf32>
    tpu.vector_store %arg7[%c0_70, %c3_71, %c0_72, %c0_73], %133 {strides = array<i32>} : memref<1x8x8x128xf32, #tpu.memory_space<vmem>>, vector<1x1x2x128xf32>,
    %134 = arith.extui %96 : vector<2x128xi1> to vector<2x128xi32>
    %135 = arith.sitofp %134 : vector<2x128xi32> to vector<2x128xf32>
    %c0_74 = arith.constant 0 : index
    %c4 = arith.constant 4 : index
    %c0_75 = arith.constant 0 : index
    %c0_76 = arith.constant 0 : index
    %136 = vector.load %arg7[%c0_74, %c4, %c0_75, %c0_76] : memref<1x8x8x128xf32, #tpu.memory_space<vmem>>, vector<1x1x2x128xf32>
    %137 = vector.shape_cast %136 : vector<1x1x2x128xf32> to vector<2x128xf32>
    %138 = arith.addf %137, %135 : vector<2x128xf32>
    %c0_77 = arith.constant 0 : index
    %c4_78 = arith.constant 4 : index
    %c0_79 = arith.constant 0 : index
    %c0_80 = arith.constant 0 : index
    %139 = vector.load %arg7[%c0_77, %c4_78, %c0_79, %c0_80] : memref<1x8x8x128xf32, #tpu.memory_space<vmem>>, vector<1x1x2x128xf32>
    %140 = vector.shape_cast %139 : vector<1x1x2x128xf32> to vector<2x128xf32>
    %141 = vector.shape_cast %138 : vector<2x128xf32> to vector<1x1x2x128xf32>
    tpu.vector_store %arg7[%c0_77, %c4_78, %c0_79, %c0_80], %141 {strides = array<i32>} : memref<1x8x8x128xf32, #tpu.memory_space<vmem>>, vector<1x1x2x128xf32>,
    %c0_81 = arith.constant 0 : index
    %c5 = arith.constant 5 : index
    %c0_82 = arith.constant 0 : index
    %c0_83 = arith.constant 0 : index
    %142 = vector.load %arg7[%c0_81, %c5, %c0_82, %c0_83] : memref<1x8x8x128xf32, #tpu.memory_space<vmem>>, vector<1x1x2x128xf32>
    %143 = vector.shape_cast %142 : vector<1x1x2x128xf32> to vector<2x128xf32>
    %144 = arith.addf %143, %103 : vector<2x128xf32>
    %c0_84 = arith.constant 0 : index
    %c5_85 = arith.constant 5 : index
    %c0_86 = arith.constant 0 : index
    %c0_87 = arith.constant 0 : index
    %145 = vector.load %arg7[%c0_84, %c5_85, %c0_86, %c0_87] : memref<1x8x8x128xf32, #tpu.memory_space<vmem>>, vector<1x1x2x128xf32>
    %146 = vector.shape_cast %145 : vector<1x1x2x128xf32> to vector<2x128xf32>
    %147 = vector.shape_cast %144 : vector<2x128xf32> to vector<1x1x2x128xf32>
    tpu.vector_store %arg7[%c0_84, %c5_85, %c0_86, %c0_87], %147 {strides = array<i32>} : memref<1x8x8x128xf32, #tpu.memory_space<vmem>>, vector<1x1x2x128xf32>,
    %148 = arith.extui %92 : vector<2x128xi1> to vector<2x128xi32>
    %149 = arith.sitofp %148 : vector<2x128xi32> to vector<2x128xf32>
    %c0_88 = arith.constant 0 : index
    %c6 = arith.constant 6 : index
    %c0_89 = arith.constant 0 : index
    %c0_90 = arith.constant 0 : index
    %150 = vector.load %arg7[%c0_88, %c6, %c0_89, %c0_90] : memref<1x8x8x128xf32, #tpu.memory_space<vmem>>, vector<1x1x2x128xf32>
    %151 = vector.shape_cast %150 : vector<1x1x2x128xf32> to vector<2x128xf32>
    %152 = arith.addf %151, %149 : vector<2x128xf32>
    %c0_91 = arith.constant 0 : index
    %c6_92 = arith.constant 6 : index
    %c0_93 = arith.constant 0 : index
    %c0_94 = arith.constant 0 : index
    %153 = vector.load %arg7[%c0_91, %c6_92, %c0_93, %c0_94] : memref<1x8x8x128xf32, #tpu.memory_space<vmem>>, vector<1x1x2x128xf32>
    %154 = vector.shape_cast %153 : vector<1x1x2x128xf32> to vector<2x128xf32>
    %155 = vector.shape_cast %152 : vector<2x128xf32> to vector<1x1x2x128xf32>
    tpu.vector_store %arg7[%c0_91, %c6_92, %c0_93, %c0_94], %155 {strides = array<i32>} : memref<1x8x8x128xf32, #tpu.memory_space<vmem>>, vector<1x1x2x128xf32>,
    return
  }
  func.func @transform_0(%arg0: i32, %arg1: i32) -> i32 {
    %c0_i32 = arith.constant 0 : i32
    %c0_i32_0 = arith.constant 0 : i32
    return %c0_i32 : i32
  }
  func.func @transform_1(%arg0: i32, %arg1: i32) -> i32 {
    %c0_i32 = arith.constant 0 : i32
    %c0_i32_0 = arith.constant 0 : i32
    return %c0_i32 : i32
  }
  func.func @transform_2(%arg0: i32, %arg1: i32) -> (i32, i32, i32, i32) {
    %c0_i32 = arith.constant 0 : i32
    %c0_i32_0 = arith.constant 0 : i32
    %c0_i32_1 = arith.constant 0 : i32
    return %arg0, %c0_i32, %arg1, %c0_i32_0 : i32, i32, i32, i32
  }
  func.func @transform_3(%arg0: i32, %arg1: i32) -> (i32, i32, i32) {
    %c0_i32 = arith.constant 0 : i32
    %c0_i32_0 = arith.constant 0 : i32
    return %arg0, %arg1, %c0_i32 : i32, i32, i32
  }
  func.func @transform_4(%arg0: i32, %arg1: i32) -> (i32, i32, i32) {
    %c0_i32 = arith.constant 0 : i32
    %c0_i32_0 = arith.constant 0 : i32
    return %arg0, %arg1, %c0_i32 : i32, i32, i32
  }
  func.func @transform_5(%arg0: i32, %arg1: i32) -> (i32, i32, i32, i32) {
    %c0_i32 = arith.constant 0 : i32
    %c0_i32_0 = arith.constant 0 : i32
    %c0_i32_1 = arith.constant 0 : i32
    %c0_i32_2 = arith.constant 0 : i32
    return %arg0, %c0_i32, %c0_i32_0, %c0_i32_1 : i32, i32, i32, i32
  }
}

</mosaic_0001>

<llo_original>
// kernel: _run_loss_stats.1
$region0: #{_run_loss_stats.1}
  #allocation0 [shape = 'u32[]', space=smem, size = 0x4, offset = 0x4, fixed_abs, tag = 'smem constant byte address 0x4 - core index']
  #allocation1 [shape = 'u32[144,128]{1,0:T(1,128)}', space=vmem, size = 0x12000, scoped, tag = 'internal scratch']
  #allocation2 [shape = 'f32[1]{0:T(128)S(6)}', space=smem, size = 0x200, scoped, tag = 'scoped memory for _run_loss_stats.1']
  %s0 = inlined_call_operand.vmem [shape: f32[4], index: 0, kind: input, shape index: {}]
  %s1 = inlined_call_operand.<no memory space> [shape: f32[1], index: 1, kind: input, shape index: {}]
  %s2 = inlined_call_operand.vmem [shape: f32[2,4,2,128], index: 2, kind: input, shape index: {}]
  %s3 = inlined_call_operand.vmem [shape: bf16[2,2,128], index: 3, kind: input, shape index: {}]
  %s4 = inlined_call_operand.vmem [shape: s8[2,2,128], index: 4, kind: input, shape index: {}]
  %s5 = inlined_call_operand.vmem [shape: f32[2,8,8,128], index: 5, kind: output, shape index: {}]
  %s6 = sld [smem:[#allocation0]]
  $region61: #{_run_loss_stats.1} parent=0
    _
  %s8 = ssub.s32 1, %s6
  %s9 = scalar_select 0, %s8, %s6
  %10 = sst [smem:[#allocation2]] %s1
  $region1: #{_run_loss_stats.1} parent=0
    #allocation3 [shape = 'u8[512]{0}', space=smem, size = 0x200, scoped, tag = 'input window, operand 0, single buffered']
    #allocation4 [shape = 's32[2]{0}', space=sflag, size = 0x8, scoped, tag = 'scoped memory for _run_loss_stats.1']
    %11 = vsyncpa [#allocation4], 0
    loop: start=0, step=1, limit=4
    $region2: #{_run_loss_stats.1} parent=1 // loop_pre_header
      _
    $region3: #{_run_loss_stats.1} parent=1 // loop_header
      %s13 = sphi 0, %s17
      %p14 = scmp.ge.s32.totalorder %s13, 4
      %s20 = sphi 0, %s32
      %s21 = sphi 0, %s28
      %s22 = sphi 0, %s20
      %s23 = sphi 0, %s21
      %s24 = sphi 0, %s22
      %s25 = sphi 0, %s23
      %s33 = sphi 0, %s33
      %s35 = sphi 0, %s33
      %s36 = sphi 0, %s35
      %s50 = sphi 0, %s36
      %s54 = sphi 0, %s54
      %s56 = sphi 0, %s54
      %s57 = sphi 0, %s56
      %s71 = sphi 0, %s57
      %s79 = sphi 0, %s81
      %s82 = sphi 0, %s79
      %s83 = sphi 0, %s82
      %s99 = sphi 0, %s83
      %s107 = sphi 0, %s109
      %s110 = sphi 0, %s107
      %s111 = sphi 0, %s110
      %s127 = sphi 0, %s111
      %s135 = sphi 0, %s137
      %s138 = sphi 0, %s135
      %s139 = sphi 0, %s138
      %s155 = sphi 0, %s139
      %s161 = sphi 0, %s163
      %s164 = sphi 0, %s161
      %s165 = sphi 0, %s164
      %s181 = sphi 0, %s165
    $region4: #{_run_loss_stats.1} parent=1 // loop_header_branch
      %16 = sbr.rel (%p14) target = $region8
    $region5: #{_run_loss_stats.1} parent=1 // loop_body
      %s18 = ssub.s32 %s13, 1
      %s19 = ssub.s32 %s13, 2
      %s26 = sadd.s32 1, %s21
      %p27 = scmp.ge.s32.totalorder %s26, 1
      %s28 = scalar_select %p27, 0, %s26
      %s29 = sadd.s32 1, %s20
      %s30 = scalar_select %p27, %s29, %s20
      %p31 = scmp.ge.s32.totalorder %s30, 2
      %s32 = scalar_select %p31, 0, %s30
      %s34 = sadd.s32 %s33, 1
      %p37 = scmp.eq.s32.totalorder %s13, 1
      %p38 = scmp.ne.s32.totalorder %s33, %s35
      %p39 = scmp.eq.s32.totalorder %s13, 0
      %p40 = por %p38, %p39
      %p41 = scmp.ne.s32.totalorder %s33, %s35
      %p42 = scmp.eq.s32.totalorder %s18, 1
      %p43 = por %p41, %p42
      %p44 = scmp.ne.s32.totalorder %s35, %s36
      %p45 = scmp.eq.s32.totalorder %s18, 0
      %p46 = por %p44, %p45
      %p47 = scmp.ne.s32.totalorder %s35, %s36
      %p48 = scmp.eq.s32.totalorder %s19, 1
      %p49 = por %p47, %p48
      %p51 = scmp.ne.s32.totalorder %s36, %s50
      %p52 = scmp.eq.s32.totalorder %s19, 0
      %p53 = por %p51, %p52
      %s55 = sadd.s32 %s54, 1
      %p58 = scmp.eq.s32.totalorder %s13, 1
      %p59 = scmp.ne.s32.totalorder %s54, %s56
      %p60 = scmp.eq.s32.totalorder %s13, 0
      %p61 = por %p59, %p60
      %p62 = scmp.ne.s32.totalorder %s54, %s56
      %p63 = scmp.eq.s32.totalorder %s18, 1
      %p64 = por %p62, %p63
      %p65 = scmp.ne.s32.totalorder %s56, %s57
      %p66 = scmp.eq.s32.totalorder %s18, 0
      %p67 = por %p65, %p66
      %p68 = scmp.ne.s32.totalorder %s56, %s57
      %p69 = scmp.eq.s32.totalorder %s19, 1
      %p70 = por %p68, %p69
      %p72 = scmp.ne.s32.totalorder %s57, %s71
      %p73 = scmp.eq.s32.totalorder %s19, 0
      %p74 = por %p72, %p73
      %s75 = ssub.s32 %s20, %s32
      %s76 = ssub.s32 %s21, %s28
      %s77 = sor.u32 %s75, %s76
      %p78 = scmp.eq.s32.totalorder %s77, 0
      %s80 = sadd.s32 %s79, 1
      %s81 = scalar_select %p78, %s79, %s80
      %p84 = pneg %p78
      %p85 = scmp.eq.s32.totalorder %s13, 1
      %p86 = por %p84, %p85
      %p87 = scmp.ne.s32.totalorder %s79, %s82
      %p88 = scmp.eq.s32.totalorder %s13, 0
      %p89 = por %p87, %p88
      %p90 = scmp.ne.s32.totalorder %s79, %s82
      %p91 = scmp.eq.s32.totalorder %s18, 1
      %p92 = por %p90, %p91
      %p93 = scmp.ne.s32.totalorder %s82, %s83
      %p94 = scmp.eq.s32.totalorder %s18, 0
      %p95 = por %p93, %p94
      %p96 = scmp.ne.s32.totalorder %s82, %s83
      %p97 = scmp.eq.s32.totalorder %s19, 1
      %p98 = por %p96, %p97
      %p100 = scmp.ne.s32.totalorder %s83, %s99
      %p101 = scmp.eq.s32.totalorder %s19, 0
      %p102 = por %p100, %p101
      %s103 = ssub.s32 %s20, %s32
      %s104 = ssub.s32 %s21, %s28
      %s105 = sor.u32 %s103, %s104
      %p106 = scmp.eq.s32.totalorder %s105, 0
      %s108 = sadd.s32 %s107, 1
      %s109 = scalar_select %p106, %s107, %s108
      %p112 = pneg %p106
      %p113 = scmp.eq.s32.totalorder %s13, 1
      %p114 = por %p112, %p113
      %p115 = scmp.ne.s32.totalorder %s107, %s110
      %p116 = scmp.eq.s32.totalorder %s13, 0
      %p117 = por %p115, %p116
      %p118 = scmp.ne.s32.totalorder %s107, %s110
      %p119 = scmp.eq.s32.totalorder %s18, 1
      %p120 = por %p118, %p119
      %p121 = scmp.ne.s32.totalorder %s110, %s111
      %p122 = scmp.eq.s32.totalorder %s18, 0
      %p123 = por %p121, %p122
      %p124 = scmp.ne.s32.totalorder %s110, %s111
      %p125 = scmp.eq.s32.totalorder %s19, 1
      %p126 = por %p124, %p125
      %p128 = scmp.ne.s32.totalorder %s111, %s127
      %p129 = scmp.eq.s32.totalorder %s19, 0
      %p130 = por %p128, %p129
      %s131 = ssub.s32 %s20, %s32
      %s132 = ssub.s32 %s21, %s28
      %s133 = sor.u32 %s131, %s132
      %p134 = scmp.eq.s32.totalorder %s133, 0
      %s136 = sadd.s32 %s135, 1
      %s137 = scalar_select %p134, %s135, %s136
      %p140 = pneg %p134
      %p141 = scmp.eq.s32.totalorder %s13, 1
      %p142 = por %p140, %p141
      %p143 = scmp.ne.s32.totalorder %s135, %s138
      %p144 = scmp.eq.s32.totalorder %s13, 0
      %p145 = por %p143, %p144
      %p146 = scmp.ne.s32.totalorder %s135, %s138
      %p147 = scmp.eq.s32.totalorder %s18, 1
      %p148 = por %p146, %p147
      %p149 = scmp.ne.s32.totalorder %s138, %s139
      %p150 = scmp.eq.s32.totalorder %s18, 0
      %p151 = por %p149, %p150
      %p152 = scmp.ne.s32.totalorder %s138, %s139
      %p153 = scmp.eq.s32.totalorder %s19, 1
      %p154 = por %p152, %p153
      %p156 = scmp.ne.s32.totalorder %s139, %s155
      %p157 = scmp.eq.s32.totalorder %s19, 0
      %p158 = por %p156, %p157
      %s159 = ssub.s32 %s20, %s32
      %p160 = scmp.eq.s32.totalorder %s159, 0
      %s162 = sadd.s32 %s161, 1
      %s163 = scalar_select %p160, %s161, %s162
      %p166 = pneg %p160
      %p167 = scmp.eq.s32.totalorder %s13, 1
      %p168 = por %p166, %p167
      %p169 = scmp.ne.s32.totalorder %s161, %s164
      %p170 = scmp.eq.s32.totalorder %s13, 0
      %p171 = por %p169, %p170
      %p172 = scmp.ne.s32.totalorder %s161, %s164
      %p173 = scmp.eq.s32.totalorder %s18, 1
      %p174 = por %p172, %p173
      %p175 = scmp.ne.s32.totalorder %s164, %s165
      %p176 = scmp.eq.s32.totalorder %s18, 0
      %p177 = por %p175, %p176
      %p178 = scmp.ne.s32.totalorder %s164, %s165
      %p179 = scmp.eq.s32.totalorder %s19, 1
      %p180 = por %p178, %p179
      %p182 = scmp.ne.s32.totalorder %s165, %s181
      %p183 = scmp.eq.s32.totalorder %s19, 0
      %p184 = por %p182, %p183
      %p185 = scmp.le.s32.totalorder 1, %s13
      %p186 = scmp.lt.s32.totalorder %s13, 3
      %p187 = pnand %p185, %p186
      %p188 = pneg %p187
      // Predicated region
      $region9: #{_run_loss_stats.1} parent=5 // pred_check
        _
      $region10: #{_run_loss_stats.1} parent=5 // pred_check_branch
        %190 = sbr.rel (%p187) target = $region12
      $region11: #{_run_loss_stats.1} parent=5 // pred_region
        %s191 = ssub.s32 %s13, 1
        // Predicated region
        $region13: #{_run_loss_stats.1} parent=11 // pred_check
          %p192 = pneg %p46
        $region14: #{_run_loss_stats.1} parent=11 // pred_check_branch
          %194 = sbr.rel (%p192) target = $region16
        $region15: #{_run_loss_stats.1} parent=11 // pred_region
          %s196 = ssub.s32 16, 16
          %197 = vsyncadd [#allocation4], %s196
          %s199 = sshll.u32 %s0, 4
          %s200 = int_to_ptr.vmem [resolvable:$true] %s199
          %202 = dma.vmem_to_smem %s200, 16, [#allocation3], [#allocation4]
        $region16: #{_run_loss_stats.1} parent=11 // pred_fallthru
          _
        // Predicated region
        $region17: #{_run_loss_stats.1} parent=11 // pred_check
          %p203 = pneg %p67
        $region18: #{_run_loss_stats.1} parent=11 // pred_check_branch
          %205 = sbr.rel (%p203) target = $region20
        $region19: #{_run_loss_stats.1} parent=11 // pred_region
          _
        $region20: #{_run_loss_stats.1} parent=11 // pred_fallthru
          _
      $region12: #{_run_loss_stats.1} parent=5 // pred_fallthru
        _
      %p206 = scmp.lt.s32.totalorder %s13, 2
      // Predicated region
      $region21: #{_run_loss_stats.1} parent=5 // pred_check
        %p207 = pneg %p206
      $region22: #{_run_loss_stats.1} parent=5 // pred_check_branch
        %209 = sbr.rel (%p207) target = $region24
      $region23: #{_run_loss_stats.1} parent=5 // pred_region
        // Predicated region
        $region25: #{_run_loss_stats.1} parent=23 // pred_check
          %p210 = pneg %p89
        $region26: #{_run_loss_stats.1} parent=23 // pred_check_branch
          %212 = sbr.rel (%p210) target = $region28
        $region27: #{_run_loss_stats.1} parent=23 // pred_region
          %p213 = scmp.lt.s32.totalorder %s20, 1
          %s214 = scalar_select %p213, %s20, 1
          %p215 = scmp.lt.s32.totalorder %s21, 0
          %s216 = scalar_select %p215, %s21, 0
          %s217 = smul.addr %s214, 4
          %s218 = sadd.s32 %s216, %s217
          %s219 = smul.addr %s218, 2
          %s220 = scalar_lea.vmem %s2, %s219
        $region28: #{_run_loss_stats.1} parent=23 // pred_fallthru
          _
        // Predicated region
        $region29: #{_run_loss_stats.1} parent=23 // pred_check
          %p221 = pneg %p117
        $region30: #{_run_loss_stats.1} parent=23 // pred_check_branch
          %223 = sbr.rel (%p221) target = $region32
        $region31: #{_run_loss_stats.1} parent=23 // pred_region
          %p224 = scmp.lt.s32.totalorder %s20, 1
          %s225 = scalar_select %p224, %s20, 1
          %p226 = scmp.lt.s32.totalorder %s21, 0
          %s227 = scalar_select %p226, %s21, 0
          %s228 = sadd.s32 %s227, %s225
          %s229 = scalar_lea.vmem %s3, %s228
        $region32: #{_run_loss_stats.1} parent=23 // pred_fallthru
          _
        // Predicated region
        $region33: #{_run_loss_stats.1} parent=23 // pred_check
          %p230 = pneg %p145
        $region34: #{_run_loss_stats.1} parent=23 // pred_check_branch
          %232 = sbr.rel (%p230) target = $region36
        $region35: #{_run_loss_stats.1} parent=23 // pred_region
          %p233 = scmp.lt.s32.totalorder %s20, 1
          %s234 = scalar_select %p233, %s20, 1
          %p235 = scmp.lt.s32.totalorder %s21, 0
          %s236 = scalar_select %p235, %s21, 0
          %s237 = sadd.s32 %s236, %s234
          %s238 = scalar_lea.vmem %s4, %s237
        $region36: #{_run_loss_stats.1} parent=23 // pred_fallthru
          _
      $region24: #{_run_loss_stats.1} parent=5 // pred_fallthru
        _
      %p239 = scmp.le.s32.totalorder 1, %s13
      %p240 = scmp.lt.s32.totalorder %s13, 3
      %p241 = pnand %p239, %p240
      %p242 = pneg %p241
      // Predicated region
      $region37: #{_run_loss_stats.1} parent=5 // pred_check
        _
      $region38: #{_run_loss_stats.1} parent=5 // pred_check_branch
        %244 = sbr.rel (%p241) target = $region40
      $region39: #{_run_loss_stats.1} parent=5 // pred_region
        %s245 = ssub.s32 %s13, 1
        // Predicated region
        $region41: #{_run_loss_stats.1} parent=39 // pred_check
          %p246 = pneg %p46
        $region42: #{_run_loss_stats.1} parent=39 // pred_check_branch
          %248 = sbr.rel (%p246) target = $region44
        $region43: #{_run_loss_stats.1} parent=39 // pred_region
          %249 = dma.done [#allocation4], 16
        $region44: #{_run_loss_stats.1} parent=39 // pred_fallthru
          _
        %250 = sfence
        %p251 = pneg %p46
        %p252 = pneg %p43
        %p253 = pneg %p67
        %p254 = pneg %p64
        %p255 = scmp.lt.s32.totalorder %s22, 1
        %s256 = scalar_select %p255, %s22, 1
        %p257 = scmp.lt.s32.totalorder %s23, 0
        %s258 = scalar_select %p257, %s23, 0
        %s259 = smul.addr %s256, 4
        %s260 = sadd.s32 %s258, %s259
        %s261 = smul.addr %s260, 2
        %s262 = scalar_lea.vmem %s2, %s261
        %p263 = pneg %p95
        %p264 = pneg %p92
        %p265 = scmp.lt.s32.totalorder %s22, 1
        %s266 = scalar_select %p265, %s22, 1
        %p267 = scmp.lt.s32.totalorder %s23, 0
        %s268 = scalar_select %p267, %s23, 0
        %s269 = sadd.s32 %s268, %s266
        %s270 = scalar_lea.vmem %s3, %s269
        %p271 = pneg %p123
        %p272 = pneg %p120
        %p273 = scmp.lt.s32.totalorder %s22, 1
        %s274 = scalar_select %p273, %s22, 1
        %p275 = scmp.lt.s32.totalorder %s23, 0
        %s276 = scalar_select %p275, %s23, 0
        %s277 = sadd.s32 %s276, %s274
        %s278 = scalar_lea.vmem %s4, %s277
        %p279 = pneg %p151
        %p280 = pneg %p148
        %p281 = pneg %p177
        %p282 = pneg %p174
        %p283 = scmp.lt.s32.totalorder %s22, 1
        %s284 = scalar_select %p283, %s22, 1
        %s285 = smul.addr %s284, 8
        %s286 = smul.addr %s285, 8
        %s287 = scalar_lea.vmem %s5, %s286
        %p288 = scmp.lt.s32.totalorder %s22, 1
        %s289 = scalar_select %p288, %s22, 1
        %p290 = scmp.lt.s32.totalorder %s23, 0
        %s291 = scalar_select %p290, %s23, 0
        %s292 = smul.addr %s289, 4
        %s293 = sadd.s32 %s291, %s292
        %s294 = smul.addr %s293, 2
        %s295 = scalar_lea.vmem %s2, %s294
        %p296 = scmp.lt.s32.totalorder %s22, 1
        %s297 = scalar_select %p296, %s22, 1
        %p298 = scmp.lt.s32.totalorder %s23, 0
        %s299 = scalar_select %p298, %s23, 0
        %s300 = sadd.s32 %s299, %s297
        %s301 = scalar_lea.vmem %s3, %s300
        %p302 = scmp.lt.s32.totalorder %s22, 1
        %s303 = scalar_select %p302, %s22, 1
        %p304 = scmp.lt.s32.totalorder %s23, 0
        %s305 = scalar_select %p304, %s23, 0
        %s306 = sadd.s32 %s305, %s303
        %s307 = scalar_lea.vmem %s4, %s306
        %p308 = scmp.lt.s32.totalorder %s22, 1
        %s309 = scalar_select %p308, %s22, 1
        %s310 = smul.addr %s309, 8
        %s311 = smul.addr %s310, 8
        %s312 = scalar_lea.vmem %s5, %s311
        %p313 = scmp.eq.s32.totalorder %s23, 0
        // Predicated region
        $region45: #{_run_loss_stats.1} parent=39 // pred_check
          %p314 = pneg %p313
        $region46: #{_run_loss_stats.1} parent=39 // pred_check_branch
          %316 = sbr.rel (%p314) target = $region48
        $region47: #{_run_loss_stats.1} parent=39 // pred_region
          %317 = vst [vmem:[%s312] sm:$0xff] 0.0
          %318 = vst [vmem:[%s312 + $0x8] sm:$0xff] 0.0
          %319 = vst [vmem:[%s312 + $0x10] sm:$0xff] 0.0
          %320 = vst [vmem:[%s312 + $0x18] sm:$0xff] 0.0
          %321 = vst [vmem:[%s312 + $0x20] sm:$0xff] 0.0
          %322 = vst [vmem:[%s312 + $0x28] sm:$0xff] 0.0
          %323 = vst [vmem:[%s312 + $0x30] sm:$0xff] 0.0
          %324 = vst [vmem:[%s312 + $0x38] sm:$0xff] 0.0
        $region48: #{_run_loss_stats.1} parent=39 // pred_fallthru
          _
        %v325 = vld [vmem:[%s295] sm:$0x3]
        %s326 = sld [smem:[#allocation3]]
        %v327 = vstv %s326
        %v328 = vmul.f32 %v325, %v327
        %s329 = scalar_lea.vmem %s295, 2
        %v330 = vld [vmem:[%s329] sm:$0x3]
        %s331 = sld [smem:[#allocation3 + $0x1]]
        %v332 = vstv %s331
        %v333 = vmul.f32 %v330, %v332
        %v334 = vadd.f32 %v328, %v333
        %s335 = scalar_lea.vmem %s295, 4
        %v336 = vld [vmem:[%s335] sm:$0x3]
        %s337 = sld [smem:[#allocation3 + $0x2]]
        %v338 = vstv %s337
        %v339 = vmul.f32 %v336, %v338
        %v340 = vadd.f32 %v334, %v339
        %s341 = scalar_lea.vmem %s295, 6
        %v342 = vld [vmem:[%s341] sm:$0x3]
        %s343 = sld [smem:[#allocation3 + $0x3]]
        %v344 = vstv %s343
        %v345 = vmul.f32 %v342, %v344
        %v346 = vadd.f32 %v340, %v345
        %s347 = sld [smem:[#allocation2]]
        %v348 = vstv %s347
        %v349 = vadd.f32 %v346, %v348
        %v350 = vlaneseq
        %v351 = vshrl.u32 %v350, 7
        %v352 = vlaneseq
        %v353 = vand.u32 %v352, 127
        %s354 = smul.u32 %s23, 2
        %v355 = vstv %s354
        %v356 = vadd.s32 %v355, %v351
        %v357 = vmul.u32 %v356, 128
        %v358 = vadd.s32 %v357, %v353
        %vm359 = vcmp.lt.s32.totalorder %v358, 256
        %v360 = vld [vmem:[%s301] sm:$0x1]
        %v361 = vunpack.c.l.bf16 %v360
        %vm362 = vcmp.eq.f32.partialorder %v361, 0.0
        %vm363 = vmand %vm362, %vm359
        %vm364 = vcmp.eq.f32.partialorder %v361, 1.0
        %vm365 = vmand %vm364, %vm359
        %v366 = vmax.f32 %v349, 0.0
        %v367 = vand.u32 2147483647, %v349
        %v368 = vsub.f32 0.0, %v367
        %v369 = vmul.f32 %v368, 1.442695
        %v370 = vpow.pop %v369
        %v371 = vadd.f32 %v370, 1.0
        %v372 = vlog2.pop %v371
        %v373 = vmul.f32 %v372, 0.6931472
        %v374 = vmul.f32 -0.5, %v370
        %v375 = vadd.f32 %v374, 1.0
        %v376 = vmul.f32 %v375, %v370
        %v377 = vand.u32 2147483647, %v370
        %vm378 = vcmp.lt.f32.partialorder %v377, 0.0004427343
        %v379 = vsel %vm378, %v376, %v373
        %v380 = vadd.f32 %v366, %v379
        %v381 = vsel %vm363, %v380, 0.0
        %v382 = vsub.f32 %v380, %v349
        %v383 = vsel %vm365, %v382, %v381
        %v384 = vmul.f32 %v349, 0.25
        %v385 = vadd.f32 %v384, 0.5
        %v386 = vmax.f32 %v385, 0.0
        %v387 = vmin.f32 %v386, 1.0
        %vm388 = vcmp.gt.f32.partialorder %v361, 0.0
        %vm389 = vcmp.lt.f32.partialorder %v361, 1.0
        %vm390 = vmand %vm388, %vm389
        %vm391 = vmand %vm390, %vm359
        %v392 = vsub.f32 %v385, %v361
        %v393 = vand.u32 2147483647, %v392
        %vm394 = vcmp.lt.f32.partialorder %v393, 0.1
        %v395 = vmul.f32 %v393, 0.5
        %v396 = vmul.f32 %v395, %v393
        %v397 = vrcp.pop 0.1
        %v398 = vmul.f32 %v396, %v397
        %v399 = vsub.f32 %v393, 0.05
        %v400 = vsel %vm394, %v398, %v399
        %v401 = vsel %vm391, %v400, %v383
        %v402 = vld [vmem:[%s307] sm:$0x1]
        %v403 = vunpack.c.0.s8 %v402
        %v404 = vcvt.s32.f32 %v403
        %vm405 = vcmp.gt.f32.partialorder %v404, 0.5
        %vm406 = vmand %vm405, %vm359
        %vm407 = vcmp.gt.f32.partialorder %v387, 0.5
        %vm408 = vmand %vm363, %vm406
        %vm409 = vmand %vm365, %vm406
        %vm410 = vmxor %vm407, 1
        %vm411 = vmand %vm408, %vm410
        %vm412 = vmand %vm409, %vm407
        %v413 = vsub.f32 %v387, %v361
        %v414 = vand.u32 2147483647, %v413
        %v415 = vsel %vm406, %v414, 0.0
        %v416 = vld [vmem:[%s312] sm:$0x3]
        %v417 = vadd.f32 %v416, %v401
        %418 = vst [vmem:[%s312] sm:$0x3] %v417
        %v419 = vsel %vm411, 1, 0
        %v420 = vcvt.s32.f32 %v419
        %s421 = scalar_lea.vmem %s312, 8
        %v422 = vld [vmem:[%s421] sm:$0x3]
        %v423 = vadd.f32 %v422, %v420
        %424 = vst [vmem:[%s421] sm:$0x3] %v423
        %v425 = vsel %vm408, 1, 0
        %v426 = vcvt.s32.f32 %v425
        %s427 = scalar_lea.vmem %s312, 16
        %v428 = vld [vmem:[%s427] sm:$0x3]
        %v429 = vadd.f32 %v428, %v426
        %430 = vst [vmem:[%s427] sm:$0x3] %v429
        %v431 = vsel %vm412, 1, 0
        %v432 = vcvt.s32.f32 %v431
        %s433 = scalar_lea.vmem %s312, 24
        %v434 = vld [vmem:[%s433] sm:$0x3]
        %v435 = vadd.f32 %v434, %v432
        %436 = vst [vmem:[%s433] sm:$0x3] %v435
        %v437 = vsel %vm409, 1, 0
        %v438 = vcvt.s32.f32 %v437
        %s439 = scalar_lea.vmem %s312, 32
        %v440 = vld [vmem:[%s439] sm:$0x3]
        %v441 = vadd.f32 %v440, %v438
        %442 = vst [vmem:[%s439] sm:$0x3] %v441
        %s443 = scalar_lea.vmem %s312, 40
        %v444 = vld [vmem:[%s443] sm:$0x3]
        %v445 = vadd.f32 %v444, %v415
        %446 = vst [vmem:[%s443] sm:$0x3] %v445
        %v447 = vsel %vm406, 1, 0
        %v448 = vcvt.s32.f32 %v447
        %s449 = scalar_lea.vmem %s312, 48
        %v450 = vld [vmem:[%s449] sm:$0x3]
        %v451 = vadd.f32 %v450, %v448
        %452 = vst [vmem:[%s449] sm:$0x3] %v451
        %p453 = scmp.lt.s32.totalorder %s22, 1
        %s454 = scalar_select %p453, %s22, 1
        %s455 = smul.addr %s454, 8
        %s456 = smul.addr %s455, 8
        %s457 = scalar_lea.vmem %s5, %s456
        // Predicated region
        $region49: #{_run_loss_stats.1} parent=39 // pred_check
          %p458 = pneg %p174
        $region50: #{_run_loss_stats.1} parent=39 // pred_check_branch
          %460 = sbr.rel (%p458) target = $region52
        $region51: #{_run_loss_stats.1} parent=39 // pred_region
          _
        $region52: #{_run_loss_stats.1} parent=39 // pred_fallthru
          _
      $region40: #{_run_loss_stats.1} parent=5 // pred_fallthru
        _
      %p461 = scmp.le.s32.totalorder 2, %s13
      // Predicated region
      $region53: #{_run_loss_stats.1} parent=5 // pred_check
        %p462 = pneg %p461
      $region54: #{_run_loss_stats.1} parent=5 // pred_check_branch
        %464 = sbr.rel (%p462) target = $region56
      $region55: #{_run_loss_stats.1} parent=5 // pred_region
        %s465 = ssub.s32 %s13, 2
        // Predicated region
        $region57: #{_run_loss_stats.1} parent=55 // pred_check
          %p466 = pneg %p180
        $region58: #{_run_loss_stats.1} parent=55 // pred_check_branch
          %468 = sbr.rel (%p466) target = $region60
        $region59: #{_run_loss_stats.1} parent=55 // pred_region
          %p469 = scmp.lt.s32.totalorder %s24, 1
          %s470 = scalar_select %p469, %s24, 1
          %s471 = smul.addr %s470, 8
          %s472 = smul.addr %s471, 8
          %s473 = scalar_lea.vmem %s5, %s472
        $region60: #{_run_loss_stats.1} parent=55 // pred_fallthru
          _
      $region56: #{_run_loss_stats.1} parent=5 // pred_fallthru
        _
    $region6: #{_run_loss_stats.1} parent=1 // loop_footer
      %s17 = sadd.s32 1, %s13
    $region7: #{_run_loss_stats.1} parent=1 // loop_footer_branch
      %12 = sbr.rel target = $region3
    $region8: #{_run_loss_stats.1} parent=1 // loop_exit
      _
    %474 = vsyncpa [#allocation4], 1
    %s475 = scalar_lea.sflag [#allocation4], 1
    %476 = vsyncpa %s475, 1

</llo_original>
